<compile_context>
chip_gen: v6e
topology: v6e:2x2x1
jax: 0.10.0
libtpu: 0.0.40
codegen_flags: <defaults>
</compile_context>

<pallas_src>
import functools

import jax
import jax.numpy as jnp
from jax.experimental import pallas as pl
from jax.experimental.pallas import tpu as pltpu


TB_CAP = 32                      # max batch rows per grid step (bounds static unroll)
VMEM_BUDGET = 8 * 1024 * 1024    # conservative working-set budget (v7x-safe)
VMEM_LIMIT = 32 * 1024 * 1024    # scoped-VMEM limit handed to Mosaic


def _round_up(x, m):
    return (x + m - 1) // m * m


def _choose_tb(batch, s_pad, emb_dim, max_fs, f_total):
    """Batch-tile size: VMEM-budgeted, multiple of 8, >= 2 grid steps when B > 8."""
    if batch <= 8:
        return batch, batch                       # single grid step; block == full batch
    # double-buffered embedding block + output block, per batch row
    per_row = 2 * (s_pad * emb_dim * 2) + 2 * 128 * 4
    # per-row loop temporaries (bf16 im2col slab + f32 conv output); few live at once
    fixed = 4 * (s_pad * max_fs * emb_dim * 2 + s_pad * _round_up(f_total, 128) * 4)
    tb = max(VMEM_BUDGET - fixed, 0) // max(per_row, 1)
    tb = int(max(8, min((tb // 8) * 8, TB_CAP)))
    # cap so the "parallel" batch axis has >= 2 steps (v7x megacore + DMA overlap)
    tb = min(tb, max(8, _round_up(-(-batch // 2), 8)))
    return tb, _round_up(batch, tb)


def make_textcnn_kernel(filter_sizes, num_filters, f_total, seq_len, c_pad, tb):
    max_fs = max(filter_sizes)

    def kernel(emb_ref, wconv_ref, misc_ref, wfc_ref, out_ref):
        s = seq_len
        w_conv = wconv_ref[...]                        # (max_fs*E, F_total) bf16
        w_fc = wfc_ref[...]                            # (F_total, C_PAD)    bf16
        conv_b = misc_ref[0:1, 0:f_total]              # (1, F_total)        f32
        fc_b = misc_ref[1:2, 0:c_pad]                  # (1, C_PAD)          f32

        # Time-position validity mask shared by every batch row: position p feeds
        # filter-size fs only if p <= s - fs.  Built once outside the row loop
        # (broadcasts are not CSE'd by JAX).
        pos = jax.lax.broadcasted_iota(jnp.int32, (s, num_filters), 0)
        valid = jnp.concatenate(
            [(pos <= (s - fs)).astype(jnp.float32) for fs in filter_sizes],
            axis=1)                                    # (S, F_total) in {0, 1}

        pooled_rows = []
        for b in range(tb):                            # static unroll over the batch tile
            # im2col: stack the max_fs time-shifted windows along K -> one K-dense
            # MXU matmul covers the whole conv bank (zero weight taps pad the
            # shorter filters).  Windows are loaded straight from the VMEM ref at
            # static sublane offsets.
            x_b = jnp.concatenate(
                [emb_ref[b, t:t + s, :] for t in range(max_fs)], axis=1)  # (S, max_fs*E)
            y_b = jnp.dot(x_b, w_conv,
                          preferred_element_type=jnp.float32)             # (S, F_total) f32
            y_b = jnp.maximum(y_b + conv_b, 0.0)       # conv bias + ReLU (f32)
            # Halo / out-of-range positions hold garbage; post-ReLU values are >= 0,
            # so zeroing them can never win the time max -> exact max-pool.
            y_b = y_b * valid
            pooled_rows.append(jnp.max(y_b, axis=0, keepdims=True))       # (1, F_total)

        pooled = jnp.concatenate(pooled_rows, axis=0)                     # (TB, F_total)
        # FC with bf16 operands, f32 accumulation (avoids f32-emulated MXU passes;
        # classifier precision is kept by the f32 accumulate).
        logits = jnp.dot(pooled.astype(jnp.bfloat16), w_fc,
                         preferred_element_type=jnp.float32) + fc_b       # (TB, C_PAD)
        out_ref[...] = logits.astype(out_ref.dtype)    # lane-dense (TB, 128) store

    return kernel


def prepare_textcnn_params(params, filter_sizes, num_filters, num_classes):
    """One-time parameter re-layout (hoisted out of the forward hot path)."""
    nf = num_filters
    f_total = nf * len(filter_sizes)
    max_fs = max(filter_sizes)
    emb_dim = params["embedding"].shape[1]
    c_pad = _round_up(max(num_classes, 1), 128)

    # im2col conv slab (max_fs*E, F_total): filter i's size-fs_i kernel occupies
    # rows [t*E, (t+1)*E) for taps t < fs_i and columns [i*F, (i+1)*F); taps
    # t >= fs_i stay zero so every filter shares the same K = max_fs*E window.
    slab = jnp.zeros((max_fs * emb_dim, f_total), jnp.float32)
    for i, (fs, w) in enumerate(zip(filter_sizes, params["conv_w"])):
        # PyTorch Conv1d weight (F, E, fs) -> (fs, E, F) -> (fs*E, F)
        w_i = jnp.transpose(w, (2, 1, 0)).reshape(fs * emb_dim, nf)
        slab = slab.at[:fs * emb_dim, i * nf:(i + 1) * nf].set(w_i)

    # Small-parameter slab: row 0 = concatenated conv biases, row 1 = fc bias
    # zero-padded to the lane-dense class width.
    misc_w = max(c_pad, _round_up(f_total, 128))
    misc = jnp.zeros((2, misc_w), jnp.float32)
    misc = misc.at[0, :f_total].set(
        jnp.concatenate([b.reshape(nf) for b in params["conv_b"]]))
    misc = misc.at[1, :num_classes].set(params["fc_b"])

    # FC slab (F_total, C_PAD) bf16 = fc_w.T with zero-padded class columns.
    w_fc = jnp.zeros((f_total, c_pad), jnp.float32)
    w_fc = w_fc.at[:, :num_classes].set(params["fc_w"].T)

    return {
        "emb_table": params["embedding"].astype(jnp.bfloat16),
        "w_conv": slab.astype(jnp.bfloat16),
        "misc": misc,
        "w_fc": w_fc.astype(jnp.bfloat16),
    }


def textcnn_forward(token_ids, prepped, filter_sizes, num_filters, num_classes):
    filter_sizes = tuple(filter_sizes)
    max_fs = max(filter_sizes)
    f_total = num_filters * len(filter_sizes)
    c_pad = _round_up(max(num_classes, 1), 128)

    emb_table = prepped["emb_table"]
    emb_dim = emb_table.shape[1]
    batch, seq = token_ids.shape
    if seq < max_fs:
        raise ValueError(f"seq_len={seq} must be >= max(filter_sizes)={max_fs}")
    s_pad = seq + max_fs - 1                       # halo rows for the im2col windows

    tb, b_pad = _choose_tb(batch, s_pad, emb_dim, max_fs, f_total)

    # Pad the tiny int32 id array (batch remainder + halo columns), NOT the big
    # (B, S, E) activation.  Padded ids use token 0; padded batch rows produce
    # garbage logits that are sliced off below -- never reuse out[:b_pad] directly.
    ids = jnp.pad(token_ids.astype(jnp.int32),
                  ((0, b_pad - batch), (0, max_fs - 1)))
    # TODO(synk): fuse this gather into the kernel (scalar-prefetch ids + a
    # VMEM-resident table or manual row DMAs) to remove the (B,S,E) HBM round trip.
    embedded = jnp.take(emb_table, ids, axis=0)    # (B_pad, S_pad, E) bf16

    # TODO(synk): add a time-tile grid axis with a running-max scratch for very
    # long sequences so the working set decouples from S on v7x's 64 MiB VMEM.
    kernel = make_textcnn_kernel(filter_sizes, num_filters, f_total, seq, c_pad, tb)
    out = pl.pallas_call(
        kernel,
        out_shape=jax.ShapeDtypeStruct((b_pad, c_pad), jnp.float32),
        grid=(b_pad // tb,),
        in_specs=[
            pl.BlockSpec((tb, s_pad, emb_dim), lambda i: (i, 0, 0)),   # embeddings
            pl.BlockSpec(prepped["w_conv"].shape, lambda i: (0, 0)),   # im2col conv slab
            pl.BlockSpec(prepped["misc"].shape, lambda i: (0, 0)),     # bias slab
            pl.BlockSpec(prepped["w_fc"].shape, lambda i: (0, 0)),     # fc slab
        ],
        out_specs=pl.BlockSpec((tb, c_pad), lambda i: (i, 0)),
        compiler_params=pltpu.CompilerParams(
            dimension_semantics=("parallel",),
            vmem_limit_bytes=VMEM_LIMIT),
    )(embedded, prepped["w_conv"], prepped["misc"], prepped["w_fc"])

    return out[:batch, :num_classes]


def textcnn_reference(token_ids, params, filter_sizes, num_filters, num_classes,
                      operand_dtype=jnp.float32):
    """Plain-JAX reference matching the PyTorch forward (eval mode, dropout = id).

    operand_dtype=bfloat16 emulates the kernel's MXU operand rounding exactly;
    float32 gives the exact PyTorch f32 semantics.
    """
    def rt(x):  # round-trip cast to the MXU operand dtype
        return x.astype(operand_dtype).astype(jnp.float32)

    emb = jnp.take(rt(params["embedding"]), token_ids, axis=0)     # (B, S, E)
    x = jnp.transpose(emb, (0, 2, 1))                              # (B, E, S) == NCL
    pooled = []
    for fs, w, b in zip(filter_sizes, params["conv_w"], params["conv_b"]):
        y = jax.lax.conv_general_dilated(
            x, rt(w), window_strides=(1,), padding="VALID",
            dimension_numbers=("NCH", "OIH", "NCH"),
            precision=jax.lax.Precision.HIGHEST)
        y = jax.nn.relu(y + b[None, :, None])
        pooled.append(jnp.max(y, axis=2))
    cat = jnp.concatenate(pooled, axis=1)                          # (B, F_total)
    return jnp.matmul(rt(cat), rt(params["fc_w"]).T,
                      precision=jax.lax.Precision.HIGHEST) + params["fc_b"]


if __name__ == "__main__":
    vocab_size, embedding_dim = 50, 32
    num_filters, filter_sizes, num_classes = 16, [2, 3, 4], 4
    batch, seq = 2, 12

    keys = jax.random.split(jax.random.PRNGKey(0), 10)
    emb_table = 0.1 * jax.random.normal(keys[0], (vocab_size, embedding_dim), jnp.float32)
    emb_table = emb_table.at[0].set(0.0)                           # padding_idx = 0
    conv_w, conv_b = [], []
    for i, fs in enumerate(filter_sizes):
        conv_w.append(0.1 * jax.random.normal(
            keys[1 + 2 * i], (num_filters, embedding_dim, fs), jnp.float32))
        conv_b.append(0.1 * jax.random.normal(
            keys[2 + 2 * i], (num_filters,), jnp.float32))
    fc_w = 0.1 * jax.random.normal(
        keys[8], (num_classes, num_filters * len(filter_sizes)), jnp.float32)
    fc_b = 0.1 * jax.random.normal(keys[9], (num_classes,), jnp.float32)
    params = dict(embedding=emb_table, conv_w=conv_w, conv_b=conv_b,
                  fc_w=fc_w, fc_b=fc_b)

    token_ids = jax.random.randint(jax.random.PRNGKey(1), (batch, seq), 0, vocab_size)

    # One-time parameter prep; hot path = id pad + gather + single pallas_call.
    prepped = prepare_textcnn_params(params, filter_sizes, num_filters, num_classes)
    fwd = jax.jit(functools.partial(
        textcnn_forward, filter_sizes=tuple(filter_sizes),
        num_filters=num_filters, num_classes=num_classes))

    out = jax.block_until_ready(fwd(token_ids, prepped))
    assert out.shape == (batch, num_classes), out.shape

    # Tight check vs. a reference that rounds matmul operands to bf16 exactly like
    # the kernel's MXU path (structure / indexing check).
    ref_bf16 = textcnn_reference(token_ids, params, filter_sizes, num_filters,
                                 num_classes, operand_dtype=jnp.bfloat16)
    assert jnp.allclose(out, ref_bf16, atol=2e-3, rtol=2e-3), (out, ref_bf16)

    # Loose sanity check vs. exact f32 PyTorch semantics (bf16 operand noise).
    ref_f32 = textcnn_reference(token_ids, params, filter_sizes, num_filters,
                                num_classes, operand_dtype=jnp.float32)
    assert jnp.allclose(out, ref_f32, atol=5e-2, rtol=5e-2), (out, ref_f32)

    print("KERNEL_OK")
</pallas_src>

<mosaic_0001>
module attributes {stable_mosaic.version = 11 : i64} {
  func.func @kernel(%arg0: i32, %arg1: memref<2x15x32xbf16, #tpu.memory_space<vmem>>, %arg2: memref<128x48xbf16, #tpu.memory_space<vmem>>, %arg3: memref<2x128xf32, #tpu.memory_space<vmem>>, %arg4: memref<48x128xbf16, #tpu.memory_space<vmem>>, %arg5: memref<2x128xf32, #tpu.memory_space<vmem>>) attributes {dimension_semantics = [#tpu.dimension_semantics<parallel>], iteration_bounds = array<i64: 1>, scalar_prefetch = 0 : i64, scratch_operands = 0 : i64, tpu.core_type = #tpu.core_type<tc>, window_params = [{transform_indices = @transform_0, window_bounds = array<i64: 2, 15, 32>}, {pipeline_mode = #tpu.pipeline_mode<synchronous>, transform_indices = @transform_1, window_bounds = array<i64: 128, 48>}, {pipeline_mode = #tpu.pipeline_mode<synchronous>, transform_indices = @transform_2, window_bounds = array<i64: 2, 128>}, {pipeline_mode = #tpu.pipeline_mode<synchronous>, transform_indices = @transform_3, window_bounds = array<i64: 48, 128>}, {transform_indices = @transform_4, window_bounds = array<i64: 2, 128>}]} {
    %c0 = arith.constant 0 : index
    %c0_0 = arith.constant 0 : index
    %0 = vector.load %arg2[%c0, %c0_0] : memref<128x48xbf16, #tpu.memory_space<vmem>>, vector<128x48xbf16>
    %c0_1 = arith.constant 0 : index
    %c0_2 = arith.constant 0 : index
    %1 = vector.load %arg4[%c0_1, %c0_2] : memref<48x128xbf16, #tpu.memory_space<vmem>>, vector<48x128xbf16>
    %c0_3 = arith.constant 0 : index
    %c0_4 = arith.constant 0 : index
    %2 = vector.load %arg3[%c0_3, %c0_4] : memref<2x128xf32, #tpu.memory_space<vmem>>, vector<1x48xf32>
    %c1 = arith.constant 1 : index
    %c0_5 = arith.constant 0 : index
    %3 = vector.load %arg3[%c1, %c0_5] : memref<2x128xf32, #tpu.memory_space<vmem>>, vector<1x128xf32>
    %4 = tpu.iota {dimensions = array<i32: 0>} : vector<12x16xi32>
    %c10_i32 = arith.constant 10 : i32
    %5 = vector.broadcast %c10_i32 : i32 to vector<12x16xi32>
    %6 = arith.cmpi sle, %4, %5 : vector<12x16xi32>
    %7 = arith.extui %6 : vector<12x16xi1> to vector<12x16xi32>
    %8 = arith.sitofp %7 : vector<12x16xi32> to vector<12x16xf32>
    %c9_i32 = arith.constant 9 : i32
    %9 = vector.broadcast %c9_i32 : i32 to vector<12x16xi32>
    %10 = arith.cmpi sle, %4, %9 : vector<12x16xi32>
    %11 = arith.extui %10 : vector<12x16xi1> to vector<12x16xi32>
    %12 = arith.sitofp %11 : vector<12x16xi32> to vector<12x16xf32>
    %c8_i32 = arith.constant 8 : i32
    %13 = vector.broadcast %c8_i32 : i32 to vector<12x16xi32>
    %14 = arith.cmpi sle, %4, %13 : vector<12x16xi32>
    %15 = arith.extui %14 : vector<12x16xi1> to vector<12x16xi32>
    %16 = arith.sitofp %15 : vector<12x16xi32> to vector<12x16xf32>
    %17 = tpu.concatenate %8, %12, %16 in 1 : vector<12x16xf32>, vector<12x16xf32>, vector<12x16xf32> -> vector<12x48xf32>
    %c0_6 = arith.constant 0 : index
    %c0_7 = arith.constant 0 : index
    %c0_8 = arith.constant 0 : index
    %18 = vector.load %arg1[%c0_6, %c0_7, %c0_8] : memref<2x15x32xbf16, #tpu.memory_space<vmem>>, vector<1x12x32xbf16>
    %19 = vector.shape_cast %18 : vector<1x12x32xbf16> to vector<12x32xbf16>
    %c0_9 = arith.constant 0 : index
    %c1_10 = arith.constant 1 : index
    %c0_11 = arith.constant 0 : index
    %20 = vector.load %arg1[%c0_9, %c1_10, %c0_11] : memref<2x15x32xbf16, #tpu.memory_space<vmem>>, vector<1x12x32xbf16>
    %21 = vector.shape_cast %20 : vector<1x12x32xbf16> to vector<12x32xbf16>
    %c0_12 = arith.constant 0 : index
    %c2 = arith.constant 2 : index
    %c0_13 = arith.constant 0 : index
    %22 = vector.load %arg1[%c0_12, %c2, %c0_13] : memref<2x15x32xbf16, #tpu.memory_space<vmem>>, vector<1x12x32xbf16>
    %23 = vector.shape_cast %22 : vector<1x12x32xbf16> to vector<12x32xbf16>
    %c0_14 = arith.constant 0 : index
    %c3 = arith.constant 3 : index
    %c0_15 = arith.constant 0 : index
    %24 = vector.load %arg1[%c0_14, %c3, %c0_15] : memref<2x15x32xbf16, #tpu.memory_space<vmem>>, vector<1x12x32xbf16>
    %25 = vector.shape_cast %24 : vector<1x12x32xbf16> to vector<12x32xbf16>
    %26 = tpu.concatenate %19, %21, %23, %25 in 1 : vector<12x32xbf16>, vector<12x32xbf16>, vector<12x32xbf16>, vector<12x32xbf16> -> vector<12x128xbf16>
    %cst = arith.constant dense<0.000000e+00> : vector<12x48xf32>
    %27 = tpu.matmul %26, %0, %cst {dimension_numbers = #tpu.dot_dimension_numbers<[1], [0], [0], [1], [0, 0, 1, 1], [], []>} : vector<12x128xbf16>, vector<128x48xbf16>, vector<12x48xf32> -> vector<12x48xf32>
    %28 = vector.broadcast %2 : vector<1x48xf32> to vector<12x48xf32>
    %29 = arith.addf %27, %28 : vector<12x48xf32>
    %cst_16 = arith.constant 0.000000e+00 : f32
    %30 = vector.broadcast %cst_16 : f32 to vector<12x48xf32>
    %31 = arith.maximumf %29, %30 : vector<12x48xf32>
    %32 = arith.mulf %31, %17 : vector<12x48xf32>
    %cst_17 = arith.constant dense<0xFF800000> : vector<48xf32>
    %33 = vector.multi_reduction <maximumf>, %32, %cst_17 [0] : vector<12x48xf32> to vector<48xf32>
    %34 = vector.shape_cast %33 : vector<48xf32> to vector<1x48xf32>
    %c1_18 = arith.constant 1 : index
    %c0_19 = arith.constant 0 : index
    %c0_20 = arith.constant 0 : index
    %35 = vector.load %arg1[%c1_18, %c0_19, %c0_20] : memref<2x15x32xbf16, #tpu.memory_space<vmem>>, vector<1x12x32xbf16>
    %36 = vector.shape_cast %35 : vector<1x12x32xbf16> to vector<12x32xbf16>
    %c1_21 = arith.constant 1 : index
    %c1_22 = arith.constant 1 : index
    %c0_23 = arith.constant 0 : index
    %37 = vector.load %arg1[%c1_21, %c1_22, %c0_23] : memref<2x15x32xbf16, #tpu.memory_space<vmem>>, vector<1x12x32xbf16>
    %38 = vector.shape_cast %37 : vector<1x12x32xbf16> to vector<12x32xbf16>
    %c1_24 = arith.constant 1 : index
    %c2_25 = arith.constant 2 : index
    %c0_26 = arith.constant 0 : index
    %39 = vector.load %arg1[%c1_24, %c2_25, %c0_26] : memref<2x15x32xbf16, #tpu.memory_space<vmem>>, vector<1x12x32xbf16>
    %40 = vector.shape_cast %39 : vector<1x12x32xbf16> to vector<12x32xbf16>
    %c1_27 = arith.constant 1 : index
    %c3_28 = arith.constant 3 : index
    %c0_29 = arith.constant 0 : index
    %41 = vector.load %arg1[%c1_27, %c3_28, %c0_29] : memref<2x15x32xbf16, #tpu.memory_space<vmem>>, vector<1x12x32xbf16>
    %42 = vector.shape_cast %41 : vector<1x12x32xbf16> to vector<12x32xbf16>
    %43 = tpu.concatenate %36, %38, %40, %42 in 1 : vector<12x32xbf16>, vector<12x32xbf16>, vector<12x32xbf16>, vector<12x32xbf16> -> vector<12x128xbf16>
    %cst_30 = arith.constant dense<0.000000e+00> : vector<12x48xf32>
    %44 = tpu.matmul %43, %0, %cst_30 {dimension_numbers = #tpu.dot_dimension_numbers<[1], [0], [0], [1], [0, 0, 1, 1], [], []>} : vector<12x128xbf16>, vector<128x48xbf16>, vector<12x48xf32> -> vector<12x48xf32>
    %45 = vector.broadcast %2 : vector<1x48xf32> to vector<12x48xf32>
    %46 = arith.addf %44, %45 : vector<12x48xf32>
    %cst_31 = arith.constant 0.000000e+00 : f32
    %47 = vector.broadcast %cst_31 : f32 to vector<12x48xf32>
    %48 = arith.maximumf %46, %47 : vector<12x48xf32>
    %49 = arith.mulf %48, %17 : vector<12x48xf32>
    %cst_32 = arith.constant dense<0xFF800000> : vector<48xf32>
    %50 = vector.multi_reduction <maximumf>, %49, %cst_32 [0] : vector<12x48xf32> to vector<48xf32>
    %51 = vector.shape_cast %50 : vector<48xf32> to vector<1x48xf32>
    %52 = tpu.concatenate %34, %51 in 0 : vector<1x48xf32>, vector<1x48xf32> -> vector<2x48xf32>
    %53 = arith.truncf %52 : vector<2x48xf32> to vector<2x48xbf16>
    %cst_33 = arith.constant dense<0.000000e+00> : vector<2x128xf32>
    %54 = tpu.matmul %53, %1, %cst_33 {dimension_numbers = #tpu.dot_dimension_numbers<[1], [0], [0], [1], [0, 0, 1, 1], [], []>} : vector<2x48xbf16>, vector<48x128xbf16>, vector<2x128xf32> -> vector<2x128xf32>
    %55 = vector.broadcast %3 : vector<1x128xf32> to vector<2x128xf32>
    %56 = arith.addf %54, %55 : vector<2x128xf32>
    %c0_34 = arith.constant 0 : index
    %c0_35 = arith.constant 0 : index
    %57 = vector.load %arg5[%c0_34, %c0_35] : memref<2x128xf32, #tpu.memory_space<vmem>>, vector<2x128xf32>
    tpu.vector_store %arg5[%c0_34, %c0_35], %56 {strides = array<i32>} : memref<2x128xf32, #tpu.memory_space<vmem>>, vector<2x128xf32>,
    return
  }
  func.func @transform_0(%arg0: i32) -> (i32, i32, i32) {
    %c0_i32 = arith.constant 0 : i32
    %c0_i32_0 = arith.constant 0 : i32
    %c0_i32_1 = arith.constant 0 : i32
    return %arg0, %c0_i32, %c0_i32_0 : i32, i32, i32
  }
  func.func @transform_1(%arg0: i32) -> (i32, i32) {
    %c0_i32 = arith.constant 0 : i32
    %c0_i32_0 = arith.constant 0 : i32
    %c0_i32_1 = arith.constant 0 : i32
    return %c0_i32, %c0_i32_0 : i32, i32
  }
  func.func @transform_2(%arg0: i32) -> (i32, i32) {
    %c0_i32 = arith.constant 0 : i32
    %c0_i32_0 = arith.constant 0 : i32
    %c0_i32_1 = arith.constant 0 : i32
    return %c0_i32, %c0_i32_0 : i32, i32
  }
  func.func @transform_3(%arg0: i32) -> (i32, i32) {
    %c0_i32 = arith.constant 0 : i32
    %c0_i32_0 = arith.constant 0 : i32
    %c0_i32_1 = arith.constant 0 : i32
    return %c0_i32, %c0_i32_0 : i32, i32
  }
  func.func @transform_4(%arg0: i32) -> (i32, i32) {
    %c0_i32 = arith.constant 0 : i32
    %c0_i32_0 = arith.constant 0 : i32
    return %arg0, %c0_i32 : i32, i32
  }
}

</mosaic_0001>

<llo_original>
// kernel: textcnn_forward.1
$region0: #{textcnn_forward.1}
  #allocation0 [shape = 'u32[]', space=smem, size = 0x4, offset = 0x4, fixed_abs, tag = 'smem constant byte address 0x4 - core index']
  #allocation1 [shape = 'u32[144,128]{1,0:T(1,128)}', space=vmem, size = 0x12000, scoped, tag = 'internal scratch']
  %s0 = inlined_call_operand.vmem [shape: bf16[2,15,32], index: 0, kind: input, shape index: {}]
  %s1 = inlined_call_operand.vmem [shape: bf16[128,48], index: 1, kind: input, shape index: {}]
  %s2 = inlined_call_operand.vmem [shape: f32[2,128], index: 2, kind: input, shape index: {}]
  %s3 = inlined_call_operand.vmem [shape: bf16[48,128], index: 3, kind: input, shape index: {}]
  %s4 = inlined_call_operand.hbm [shape: f32[2,128], index: 4, kind: output, shape index: {}]
  %s5 = sld [smem:[#allocation0]]
  $region26: #{textcnn_forward.1} parent=0
    _
  %s7 = ssub.s32 1, %s5
  %s8 = scalar_select 0, %s7, %s5
  $region1: #{textcnn_forward.1} parent=0
    #allocation2 [shape = 'u8[1024]{0}', space=vmem, size = 0x400, scoped, tag = 'output window, operand 0, single buffered']
    #allocation3 [shape = 's32[1]{0}', space=sflag, size = 0x4, scoped, tag = 'scoped memory for textcnn_forward.1']
    %9 = vsyncpa [#allocation3], 0
    // Predicated region
    $region2: #{textcnn_forward.1} parent=1 // pred_check
      _
    $region3: #{textcnn_forward.1} parent=1 // pred_check_branch
      %11 = sbr.rel (0) target = $region5
    $region4: #{textcnn_forward.1} parent=1 // pred_region
      _
    $region5: #{textcnn_forward.1} parent=1 // pred_fallthru
      _
    // Predicated region
    $region6: #{textcnn_forward.1} parent=1 // pred_check
      _
    $region7: #{textcnn_forward.1} parent=1 // pred_check_branch
      %13 = sbr.rel (0) target = $region9
    $region8: #{textcnn_forward.1} parent=1 // pred_region
      _
    $region9: #{textcnn_forward.1} parent=1 // pred_fallthru
      _
    // Predicated region
    $region10: #{textcnn_forward.1} parent=1 // pred_check
      _
    $region11: #{textcnn_forward.1} parent=1 // pred_check_branch
      %15 = sbr.rel (0) target = $region13
    $region12: #{textcnn_forward.1} parent=1 // pred_region
      _
    $region13: #{textcnn_forward.1} parent=1 // pred_fallthru
      _
    // Predicated region
    $region14: #{textcnn_forward.1} parent=1 // pred_check
      _
    $region15: #{textcnn_forward.1} parent=1 // pred_check_branch
      %17 = sbr.rel (0) target = $region17
    $region16: #{textcnn_forward.1} parent=1 // pred_region
      _
    $region17: #{textcnn_forward.1} parent=1 // pred_fallthru
      _
    %v19 = vld [vmem:[%s1] sm:$0xf]
    %v20 = vld [vmem:[%s1 + $0x4] sm:$0xf]
    %v21 = vld [vmem:[%s1 + $0x8] sm:$0xf]
    %v22 = vld [vmem:[%s1 + $0xc] sm:$0xf]
    %v23 = vld [vmem:[%s1 + $0x10] sm:$0xf]
    %v24 = vld [vmem:[%s1 + $0x14] sm:$0xf]
    %v25 = vld [vmem:[%s1 + $0x18] sm:$0xf]
    %v26 = vld [vmem:[%s1 + $0x1c] sm:$0xf]
    %v27 = vld [vmem:[%s1 + $0x20] sm:$0xf]
    %v28 = vld [vmem:[%s1 + $0x24] sm:$0xf]
    %v29 = vld [vmem:[%s1 + $0x28] sm:$0xf]
    %v30 = vld [vmem:[%s1 + $0x2c] sm:$0xf]
    %v31 = vld [vmem:[%s1 + $0x30] sm:$0xf]
    %v32 = vld [vmem:[%s1 + $0x34] sm:$0xf]
    %v33 = vld [vmem:[%s1 + $0x38] sm:$0xf]
    %v34 = vld [vmem:[%s1 + $0x3c] sm:$0xf]
    %v35 = vld [vmem:[%s3] sm:$0xf]
    %v36 = vld [vmem:[%s3 + $0x4] sm:$0xf]
    %v37 = vld [vmem:[%s3 + $0x8] sm:$0xf]
    %v38 = vld [vmem:[%s3 + $0xc] sm:$0xf]
    %v39 = vld [vmem:[%s3 + $0x10] sm:$0xf]
    %v40 = vld [vmem:[%s3 + $0x14] sm:$0xf]
    %v41 = vld [vmem:[%s2] sm:$0x1]
    %v42 = vld [vmem:[%s2 + $0x1] sm:$0x1]
    %v43 = vlaneseq
    %v44 = vshrl.u32 %v43, 7
    %v45 = vadd.s32 %v44, 8
    %vm46 = vcmp.le.s32.totalorder %v44, 10
    %vm47 = vcmp.le.s32.totalorder %v45, 10
    %v48 = vsel %vm46, 1, 0
    %v49 = vsel %vm47, 1, 0
    %v50 = vcvt.s32.f32 %v48
    %v51 = vcvt.s32.f32 %v49
    %vm52 = vcmp.le.s32.totalorder %v44, 9
    %vm53 = vcmp.le.s32.totalorder %v45, 9
    %v54 = vsel %vm52, 1, 0
    %v55 = vsel %vm53, 1, 0
    %v56 = vcvt.s32.f32 %v54
    %v57 = vcvt.s32.f32 %v55
    %vm58 = vcmp.le.s32.totalorder %v44, 8
    %vm59 = vcmp.le.s32.totalorder %v45, 8
    %v60 = vsel %vm58, 1, 0
    %v61 = vsel %vm59, 1, 0
    %v62 = vcvt.s32.f32 %v60
    %v63 = vcvt.s32.f32 %v61
    %vm64 = vcmask 130048
    %v65 = vsel %vm64, %v50, %v56
    %v66 = vsel %vm64, %v51, %v57
    %vm67 = vcmask 261120
    %v68 = vsel %vm67, %v65, %v62
    %v69 = vsel %vm67, %v66, %v63
    %v70 = vld [vmem:[%s0] sm:$0xf]
    %v71 = vld [vmem:[%s0 + $0x4] sm:$0x3]
    %v72 = vld [vmem:[%s0 + $0x4] sm:$0x7]
    %v73 = vld [vmem:[%s0] sm:$0xe]
    %v74 = vld [vmem:[%s0 + $0x4] sm:$0xf]
    %v77 = vunpack.c.l.b16 %v70
    %v78 = vunpack.c.l.b16 %v71
    %v79 = vpack.c.b16 %v78, %v77
    %v81 = vunpack.c.l.b16 %v72
    %v82 = vpack.c.b16 %v81, %v77
    %v84 = vshrl.u32 %v82, 16
    %v86 = vshll.u32 %v82, 16
    %v88 = vrot.slane %v86, 1
    %v89 = vor.u32 %v84, %v88
    %90 = vrot.lane.b32.xlu0 %v89, 32
    %v91 = vpop.permute.xlu0 %90
    %v93 = vunpack.c.l.b16 %v73
    %v94 = vpack.c.b16 %v81, %v93
    %v95 = vrot.slane %v94, 1
    %96 = vrot.lane.b32.xlu0 %v95, 64
    %v97 = vpop.permute.xlu0 %96
    %v99 = vunpack.c.l.b16 %v74
    %v100 = vpack.c.b16 %v99, %v93
    %v102 = vshrl.u32 %v100, 16
    %v104 = vrot.slane %v102, 1
    %v105 = vshll.u32 %v100, 16
    %v107 = vrot.slane %v105, 2
    %v108 = vor.u32 %v104, %v107
    %109 = vrot.lane.b32.xlu0 %v108, 96
    %v110 = vpop.permute.xlu0 %109
    %v113 = vsel %vm67, %v79, %v91
    %vm114 = vcmask 523264
    %v116 = vsel %vm114, %v113, %v97
    %vm117 = vcmask 785408
    %v119 = vsel %vm117, %v116, %v110
    %v121 = vlaneseq
    %v122 = vshrl.u32 %v121, 7
    %v123 = vsub.s32 0, %v122
    %v124 = vrot.slane %v41, %v123
    %v141 = vunpack.c.l.b16 %v19
    %v142 = vunpack.c.l.b16 %v20
    %v143 = vunpack.c.l.b16 %v21
    %v144 = vunpack.c.l.b16 %v22
    %v145 = vunpack.c.l.b16 %v23
    %v146 = vunpack.c.l.b16 %v24
    %v147 = vunpack.c.l.b16 %v25
    %v148 = vunpack.c.l.b16 %v26
    %v149 = vunpack.c.l.b16 %v27
    %v150 = vunpack.c.l.b16 %v28
    %v151 = vunpack.c.l.b16 %v29
    %v152 = vunpack.c.l.b16 %v30
    %v153 = vunpack.c.l.b16 %v31
    %v154 = vunpack.c.l.b16 %v32
    %v155 = vunpack.c.l.b16 %v33
    %v156 = vunpack.c.l.b16 %v34
    %v157 = vpack.c.b16 %v142, %v141
    %v158 = vpack.c.b16 %v144, %v143
    %v159 = vpack.c.b16 %v146, %v145
    %v160 = vpack.c.b16 %v148, %v147
    %v161 = vpack.c.b16 %v150, %v149
    %v162 = vpack.c.b16 %v152, %v151
    %v163 = vpack.c.b16 %v154, %v153
    %v164 = vpack.c.b16 %v156, %v155
    %173 = vmatprep.subr.bf16.mxu0 0
    %174 = vmatpush1.bf16.msra.mxu0 %v164
    %175 = vmatprep.subr.bf16.mxu0 0
    %176 = vmatpush1.bf16.msra.mxu0 %v163
    %177 = vmatprep.subr.bf16.mxu0 0
    %178 = vmatpush1.bf16.msra.mxu0 %v162
    %179 = vmatprep.subr.bf16.mxu0 0
    %180 = vmatpush1.bf16.msra.mxu0 %v161
    %181 = vmatprep.subr.bf16.mxu0 0
    %182 = vmatpush1.bf16.msra.mxu0 %v160
    %183 = vmatprep.subr.bf16.mxu0 0
    %184 = vmatpush1.bf16.msra.mxu0 %v159
    %185 = vmatprep.subr.bf16.mxu0 0
    %186 = vmatpush1.bf16.msra.mxu0 %v158
    %187 = vmatprep.subr.bf16.mxu0 0
    %188 = vmatpush1.bf16.msra.mxu0 %v157
    %189 = vmatprep.subr.bf16.mxu0 0
    %190 = vmatpush2.bf16.msra.mxu0 0
    %191 = vmatprep.subr.bf16.mxu0 0
    %192 = vmatpush2.bf16.msra.mxu0 0
    %193 = vmatprep.subr.bf16.mxu0 0
    %194 = vmatpush2.bf16.msra.mxu0 0
    %195 = vmatprep.subr.bf16.mxu0 0
    %196 = vmatpush2.bf16.msra.mxu0 0
    %197 = vmatprep.subr.bf16.mxu0 0
    %198 = vmatpush2.bf16.msra.mxu0 0
    %199 = vmatprep.subr.bf16.mxu0 0
    %200 = vmatpush2.bf16.msra.mxu0 0
    %201 = vmatprep.subr.bf16.mxu0 0
    %202 = vmatpush2.bf16.msra.mxu0 0
    %203 = vmatprep.subr.bf16.mxu0 0
    %204 = vmatpush2.bf16.msra.mxu0 0
    %205 = vmatprep.mubr.bf16.mxu0 0
    %206 = vmatmul.mubr.bf16.gmra.mxu0 %v119
    %v207 = vpop.f32.mrf.mxu0
    %v208 = vadd.f32 %v124, %v207
    %v209 = vpop.f32.mrf.mxu0
    %v210 = vpop.f32.mrf.mxu0
    %v211 = vadd.f32 %v124, %v210
    %v212 = vpop.f32.mrf.mxu0
    %213 = vdwg.mxu0
    %v214 = vmax.f32 %v208, 0.0
    %v215 = vmax.f32 %v211, 0.0
    %v216 = vmul.f32 %v214, %v68
    %v217 = vmul.f32 %v215, %v69
    %vm218 = vcmask 392192
    %v219 = vsel %vm218, %v216, -inf
    %vm220 = vcmask 388096
    %v221 = vsel %vm220, %v217, -inf
    %v222 = vmax.f32 %v219, %v221
    %v223 = vrot.slane %v222, 4
    %v224 = vmax.f32 %v222, %v223
    %v225 = vrot.slane %v224, 2
    %v226 = vmax.f32 %v224, %v225
    %v227 = vrot.slane %v226, 1
    %v228 = vmax.f32 %v226, %v227
    %s229 = scalar_lea.vmem %s0, 8
    %v230 = vld [vmem:[%s229] sm:$0xf]
    %v231 = vld [vmem:[%s229 + $0x4] sm:$0x3]
    %v232 = vld [vmem:[%s229 + $0x4] sm:$0x7]
    %v233 = vld [vmem:[%s229] sm:$0xe]
    %v234 = vld [vmem:[%s229 + $0x4] sm:$0xf]
    %v237 = vunpack.c.l.b16 %v230
    %v238 = vunpack.c.l.b16 %v231
    %v239 = vpack.c.b16 %v238, %v237
    %v241 = vunpack.c.l.b16 %v232
    %v242 = vpack.c.b16 %v241, %v237
    %v244 = vshrl.u32 %v242, 16
    %v246 = vshll.u32 %v242, 16
    %v248 = vrot.slane %v246, 1
    %v249 = vor.u32 %v244, %v248
    %250 = vrot.lane.b32.xlu0 %v249, 32
    %v251 = vpop.permute.xlu0 %250
    %v253 = vunpack.c.l.b16 %v233
    %v254 = vpack.c.b16 %v241, %v253
    %v255 = vrot.slane %v254, 1
    %256 = vrot.lane.b32.xlu0 %v255, 64
    %v257 = vpop.permute.xlu0 %256
    %v259 = vunpack.c.l.b16 %v234
    %v260 = vpack.c.b16 %v259, %v253
    %v262 = vshrl.u32 %v260, 16
    %v264 = vrot.slane %v262, 1
    %v265 = vshll.u32 %v260, 16
    %v267 = vrot.slane %v265, 2
    %v268 = vor.u32 %v264, %v267
    %269 = vrot.lane.b32.xlu0 %v268, 96
    %v270 = vpop.permute.xlu0 %269
    %v273 = vsel %vm67, %v239, %v251
    %v275 = vsel %vm114, %v273, %v257
    %v277 = vsel %vm117, %v275, %v270
    %279 = vmatprep.subr.bf16.mxu0 0
    %280 = vmatpush1.bf16.msra.mxu0 %v164
    %281 = vmatprep.subr.bf16.mxu0 0
    %282 = vmatpush1.bf16.msra.mxu0 %v163
    %283 = vmatprep.subr.bf16.mxu0 0
    %284 = vmatpush1.bf16.msra.mxu0 %v162
    %285 = vmatprep.subr.bf16.mxu0 0
    %286 = vmatpush1.bf16.msra.mxu0 %v161
    %287 = vmatprep.subr.bf16.mxu0 0
    %288 = vmatpush1.bf16.msra.mxu0 %v160
    %289 = vmatprep.subr.bf16.mxu0 0
    %290 = vmatpush1.bf16.msra.mxu0 %v159
    %291 = vmatprep.subr.bf16.mxu0 0
    %292 = vmatpush1.bf16.msra.mxu0 %v158
    %293 = vmatprep.subr.bf16.mxu0 0
    %294 = vmatpush1.bf16.msra.mxu0 %v157
    %295 = vmatprep.subr.bf16.mxu0 0
    %296 = vmatpush2.bf16.msra.mxu0 0
    %297 = vmatprep.subr.bf16.mxu0 0
    %298 = vmatpush2.bf16.msra.mxu0 0
    %299 = vmatprep.subr.bf16.mxu0 0
    %300 = vmatpush2.bf16.msra.mxu0 0
    %301 = vmatprep.subr.bf16.mxu0 0
    %302 = vmatpush2.bf16.msra.mxu0 0
    %303 = vmatprep.subr.bf16.mxu0 0
    %304 = vmatpush2.bf16.msra.mxu0 0
    %305 = vmatprep.subr.bf16.mxu0 0
    %306 = vmatpush2.bf16.msra.mxu0 0
    %307 = vmatprep.subr.bf16.mxu0 0
    %308 = vmatpush2.bf16.msra.mxu0 0
    %309 = vmatprep.subr.bf16.mxu0 0
    %310 = vmatpush2.bf16.msra.mxu0 0
    %311 = vmatprep.mubr.bf16.mxu0 0
    %312 = vmatmul.mubr.bf16.gmra.mxu0 %v277
    %v313 = vpop.f32.mrf.mxu0
    %v314 = vadd.f32 %v124, %v313
    %v315 = vpop.f32.mrf.mxu0
    %v316 = vpop.f32.mrf.mxu0
    %v317 = vadd.f32 %v124, %v316
    %v318 = vpop.f32.mrf.mxu0
    %319 = vdwg.mxu0
    %v320 = vmax.f32 %v314, 0.0
    %v321 = vmax.f32 %v317, 0.0
    %v322 = vmul.f32 %v320, %v68
    %v323 = vmul.f32 %v321, %v69
    %v324 = vsel %vm218, %v322, -inf
    %v325 = vsel %vm220, %v323, -inf
    %v326 = vmax.f32 %v324, %v325
    %v327 = vrot.slane %v326, 4
    %v328 = vmax.f32 %v326, %v327
    %v329 = vrot.slane %v328, 2
    %v330 = vmax.f32 %v328, %v329
    %v331 = vrot.slane %v330, 1
    %v332 = vmax.f32 %v330, %v331
    %vm333 = vcmask 1040384
    %v334 = vsel %vm333, %v228, %v332
    %v335 = vpack.c.bf16 %v334, %v334
    %v336 = vlaneseq
    %v337 = vshrl.u32 %v336, 7
    %v338 = vsub.s32 0, %v337
    %v339 = vrot.slane %v42, %v338
    %v346 = vunpack.c.l.b16 %v35
    %v347 = vunpack.c.l.b16 %v36
    %v348 = vunpack.c.l.b16 %v37
    %v349 = vunpack.c.l.b16 %v38
    %v350 = vunpack.c.l.b16 %v39
    %v351 = vunpack.c.l.b16 %v40
    %v352 = vpack.c.b16 %v347, %v346
    %v353 = vpack.c.b16 %v349, %v348
    %v354 = vpack.c.b16 %v351, %v350
    %v359 = vsel %vm218, %v335, 0
    %361 = vmatprep.subr.bf16.mxu0 0
    %362 = vmatpush1.bf16.msra.mxu0 0
    %363 = vmatprep.subr.bf16.mxu0 0
    %364 = vmatpush1.bf16.msra.mxu0 0
    %365 = vmatprep.subr.bf16.mxu0 0
    %366 = vmatpush1.bf16.msra.mxu0 0
    %367 = vmatprep.subr.bf16.mxu0 0
    %368 = vmatpush1.bf16.msra.mxu0 0
    %369 = vmatprep.subr.bf16.mxu0 0
    %370 = vmatpush1.bf16.msra.mxu0 0
    %371 = vmatprep.subr.bf16.mxu0 0
    %372 = vmatpush1.bf16.msra.mxu0 %v354
    %373 = vmatprep.subr.bf16.mxu0 0
    %374 = vmatpush1.bf16.msra.mxu0 %v353
    %375 = vmatprep.subr.bf16.mxu0 0
    %376 = vmatpush1.bf16.msra.mxu0 %v352
    %377 = vmatprep.subr.bf16.mxu0 0
    %378 = vmatpush2.bf16.msra.mxu0 0
    %379 = vmatprep.subr.bf16.mxu0 0
    %380 = vmatpush2.bf16.msra.mxu0 0
    %381 = vmatprep.subr.bf16.mxu0 0
    %382 = vmatpush2.bf16.msra.mxu0 0
    %383 = vmatprep.subr.bf16.mxu0 0
    %384 = vmatpush2.bf16.msra.mxu0 0
    %385 = vmatprep.subr.bf16.mxu0 0
    %386 = vmatpush2.bf16.msra.mxu0 0
    %387 = vmatprep.subr.bf16.mxu0 0
    %388 = vmatpush2.bf16.msra.mxu0 0
    %389 = vmatprep.subr.bf16.mxu0 0
    %390 = vmatpush2.bf16.msra.mxu0 0
    %391 = vmatprep.subr.bf16.mxu0 0
    %392 = vmatpush2.bf16.msra.mxu0 0
    %393 = vmatprep.mubr.bf16.mxu0 0
    %394 = vmatmul.mubr.bf16.gmra.mxu0 %v359
    %v395 = vpop.f32.mrf.mxu0
    %v396 = vadd.f32 %v339, %v395
    %v397 = vpop.f32.mrf.mxu0
    %v398 = vpop.f32.mrf.mxu0
    %v399 = vpop.f32.mrf.mxu0
    %400 = vdwg.mxu0
    %401 = vst [vmem:[#allocation2] sm:$0x3] %v396
    // Predicated region
    $region18: #{textcnn_forward.1} parent=1 // pred_check
      _
    $region19: #{textcnn_forward.1} parent=1 // pred_check_branch
      %403 = sbr.rel (0) target = $region21
    $region20: #{textcnn_forward.1} parent=1 // pred_region
      %s405 = ssub.s32 32, 32
      %406 = vsyncadd [#allocation3], %s405
      %s408 = sshll.u32 [#allocation2], 4
      %s409 = int_to_ptr.vmem [resolvable:$true] %s408
      %411 = dma.vmem_to_hbm [thread:$0]  %s409, 32, %s4, [#allocation3]
    $region21: #{textcnn_forward.1} parent=1 // pred_fallthru
      _
    // Predicated region
    $region22: #{textcnn_forward.1} parent=1 // pred_check
      _
    $region23: #{textcnn_forward.1} parent=1 // pred_check_branch
      %413 = sbr.rel (0) target = $region25
    $region24: #{textcnn_forward.1} parent=1 // pred_region
      %414 = dma.done [#allocation3], 32
    $region25: #{textcnn_forward.1} parent=1 // pred_fallthru
      _
    %415 = vsyncpa [#allocation3], 1

</llo_original>
